<compile_context>
chip_gen: v6e
topology: v6e:2x2x1
jax: 0.10.0
libtpu: 0.0.40
codegen_flags: <defaults>
</compile_context>

<pallas_src>
import functools
import numpy as np
import jax
import jax.numpy as jnp
from jax.experimental import pallas as pl
from jax.experimental.pallas import tpu as pltpu


LANE = 128  # TPU lane width


def _round_up(x, m):
    return ((x + m - 1) // m) * m


def _vmem_limit_bytes():
    """Generation-aware VMEM budget: ~75% of physical capacity, capped at
    100 MiB (v5e/v6e: 128 MiB -> 96 MiB; v7x: 64 MiB -> 48 MiB)."""
    cap = 64 * 1024 * 1024
    try:
        cap = int(pltpu.get_tpu_info().vmem_capacity_bytes)
    except Exception:
        pass
    return max(32 * 1024 * 1024, min((cap * 3) // 4, 100 * 1024 * 1024))


def _pick_tiles(Kdim, C2, OHOW, vmem_limit, in_bytes):
    """Choose (K block, padded K, grid_k, M tile, padded M, grid_m)."""
    if Kdim <= 1024:
        kb = _round_up(Kdim, 16)        # single K block, no 128-padding in HBM
    else:
        kb = 512                        # K reduction grid axis for large K
    Kp = _round_up(Kdim, kb)
    grid_k = Kp // kb

    budget = vmem_limit // 2            # headroom for compiler scratch etc.
    tm = 128
    for cand in (1024, 512, 256, 128):
        need = (2 * kb * cand * in_bytes      # patches block (double-buffered)
                + 2 * C2 * kb * in_bytes      # weight block (double-buffered)
                + 2 * C2 * cand * 4           # y writeback (double-buffered)
                + C2 * cand * 4)              # f32 accumulator scratch
        if need <= budget:
            tm = cand
            break
    tm = min(tm, _round_up(OHOW, LANE))
    Mp = _round_up(OHOW, tm)
    return kb, Kp, grid_k, tm, Mp, Mp // tm


# ---------------- Pallas kernels ----------------

def conv_lrelu_stats_kernel(w_ref, p_ref, y_ref, sum_ref, sq_ref, acc_ref, *,
                            neg_slope):
    """One (n, m-tile) output block:  W(C2,kb) @ patches^T(kb,TM) on the MXU,
    f32 accumulation across the K grid axis in VMEM scratch, fused LeakyReLU,
    and fused per-channel partial sum / sum-of-squares for BatchNorm.

    Zero-padded K rows and zero-padded M columns contribute exactly 0 to the
    accumulator and to the statistics, so no masking is needed."""
    kk = pl.program_id(2)

    @pl.when(kk == 0)
    def _init():
        acc_ref[...] = jnp.zeros_like(acc_ref)

    acc_ref[...] += jnp.dot(w_ref[...], p_ref[...],
                            preferred_element_type=jnp.float32)

    @pl.when(kk == pl.num_programs(2) - 1)
    def _finalize():
        acc = acc_ref[...]                                  # (C2, TM) f32
        y = jnp.where(acc >= 0, acc, acc * neg_slope)       # f32 VPU (v5e-safe)
        y_ref[...] = y.astype(y_ref.dtype)
        sum_ref[...] = jnp.sum(y, axis=-1, keepdims=True)   # (C2, 1) partial
        sq_ref[...] = jnp.sum(y * y, axis=-1, keepdims=True)


def bn_apply_kernel(y_ref, scale_ref, shift_ref, o_ref):
    # Per-channel normalize folded into one FMA:
    #   y * (gamma * inv_std) + (beta - mean * gamma * inv_std)
    # scale/shift are (C2, 1) and broadcast along the lane (M) axis.
    o_ref[...] = y_ref[...] * scale_ref[...] + shift_ref[...]


# ---------------- Wrapper ----------------

def conv_module_forward(x, w, gamma, beta, *, k, s, p, d, eps=1e-5,
                        compute_dtype=jnp.bfloat16):
    """x: (N, C1, H, W) f32, w: (C2, C1, k, k) f32 (OIHW). Returns NCHW f32.

    MXU operands are cast to `compute_dtype` (bf16 by default: half the patch
    DMA bytes, native MXU rate); accumulation, activation and BN stay f32."""
    N, C1, H, W = x.shape
    C2 = w.shape[0]
    neg_slope = float(C2)  # LeakyReLU(c2) -> negative_slope == c2 (module quirk)

    OH = (H + 2 * p - d * (k - 1) - 1) // s + 1
    OW = (W + 2 * p - d * (k - 1) - 1) // s + 1
    OHOW = OH * OW
    Kdim = C1 * k * k

    in_bytes = np.dtype(compute_dtype).itemsize
    vmem_limit = _vmem_limit_bytes()
    kb, Kp, grid_k, TM, Mp, grid_m = _pick_tiles(Kdim, C2, OHOW, vmem_limit,
                                                 in_bytes)

    # ---- transposed-GEMM data layout (no NCHW<->NHWC transposes) ----
    # patches^T: (N, K, OH*OW) with K ordered (c1, kh, kw) so the OIHW weight
    # reshape needs no transpose; columns ordered (oh, ow) per image so the
    # kernel output is already in NCHW order.
    x_pad = jnp.pad(x, ((0, 0), (0, 0), (p, p), (p, p)))
    cols = []
    for kh in range(k):
        for kw in range(k):
            h0, w0 = kh * d, kw * d
            cols.append(x_pad[:, :, h0:h0 + (OH - 1) * s + 1:s,
                              w0:w0 + (OW - 1) * s + 1:s])      # (N, C1, OH, OW)
    patches = jnp.stack(cols, axis=2).reshape(N, Kdim, OHOW)    # K = (c1, kh, kw)
    patches = jnp.pad(patches, ((0, 0), (0, Kp - Kdim), (0, Mp - OHOW)))
    patches = patches.astype(compute_dtype)

    w_mat = jnp.pad(w.reshape(C2, Kdim), ((0, 0), (0, Kp - Kdim)))
    w_mat = w_mat.astype(compute_dtype)

    # ---- pass 1: conv (matmul) + LeakyReLU + per-tile partial BN stats ----
    y, psum, psq = pl.pallas_call(
        functools.partial(conv_lrelu_stats_kernel, neg_slope=neg_slope),
        out_shape=(
            jax.ShapeDtypeStruct((N, C2, Mp), jnp.float32),
            jax.ShapeDtypeStruct((N, grid_m, C2, 1), jnp.float32),
            jax.ShapeDtypeStruct((N, grid_m, C2, 1), jnp.float32),
        ),
        grid=(N, grid_m, grid_k),
        in_specs=[
            pl.BlockSpec((C2, kb), lambda n, i, kk: (0, kk)),
            pl.BlockSpec((None, kb, TM), lambda n, i, kk: (n, kk, i)),
        ],
        out_specs=(
            pl.BlockSpec((None, C2, TM), lambda n, i, kk: (n, 0, i)),
            pl.BlockSpec((None, None, C2, 1), lambda n, i, kk: (n, i, 0, 0)),
            pl.BlockSpec((None, None, C2, 1), lambda n, i, kk: (n, i, 0, 0)),
        ),
        scratch_shapes=[pltpu.VMEM((C2, TM), jnp.float32)],
        compiler_params=pltpu.CompilerParams(
            dimension_semantics=("parallel", "parallel", "arbitrary"),
            vmem_limit_bytes=vmem_limit),
    )(w_mat, patches)

    # ---- tiny per-channel epilogue: batch mean / biased var -> scale, shift ----
    m_total = float(N * OHOW)
    csum = jnp.sum(psum, axis=(0, 1))               # (C2, 1)
    csq = jnp.sum(psq, axis=(0, 1))                 # (C2, 1)
    mean = csum / m_total
    var = jnp.maximum(csq / m_total - mean * mean, 0.0)
    inv = jax.lax.rsqrt(var + eps)
    scale = gamma.reshape(C2, 1) * inv
    shift = beta.reshape(C2, 1) - mean * scale

    # ---- pass 2: normalize + affine, fully parallel, y aliased into output ----
    y2 = pl.pallas_call(
        bn_apply_kernel,
        out_shape=jax.ShapeDtypeStruct((N, C2, Mp), jnp.float32),
        grid=(N, grid_m),
        in_specs=[
            pl.BlockSpec((None, C2, TM), lambda n, i: (n, 0, i)),
            pl.BlockSpec((C2, 1), lambda n, i: (0, 0)),
            pl.BlockSpec((C2, 1), lambda n, i: (0, 0)),
        ],
        out_specs=pl.BlockSpec((None, C2, TM), lambda n, i: (n, 0, i)),
        input_output_aliases={0: 0},                 # y is dead after this pass
        compiler_params=pltpu.CompilerParams(
            dimension_semantics=("parallel", "parallel"),
            vmem_limit_bytes=vmem_limit),
    )(y, scale, shift)

    # Crop the padded spatial columns; layout is already NCHW -> no transpose.
    return y2[:, :, :OHOW].reshape(N, C2, OH, OW)


# ---------------- Pure-JAX reference (for correctness check) ----------------

def reference_forward(x, w, gamma, beta, *, k, s, p, d, eps=1e-5):
    C2 = w.shape[0]
    neg_slope = float(C2)
    y = jax.lax.conv_general_dilated(
        x, w, window_strides=(s, s), padding=[(p, p), (p, p)],
        rhs_dilation=(d, d), dimension_numbers=("NCHW", "OIHW", "NCHW"))
    y = jnp.where(y >= 0, y, y * neg_slope)
    mean = y.mean(axis=(0, 2, 3), keepdims=True)
    var = ((y - mean) ** 2).mean(axis=(0, 2, 3), keepdims=True)
    return (y - mean) / jnp.sqrt(var + eps) * gamma.reshape(1, -1, 1, 1) \
        + beta.reshape(1, -1, 1, 1)


if __name__ == "__main__":
    # Small shapes consistent with the module: c1=4, c2=8, k=3, p=1, s=1, d=1
    N, C1, C2, H, W = 2, 4, 8, 16, 16
    k, p, s, d = 3, 1, 1, 1

    key = jax.random.PRNGKey(0)
    kx, kw = jax.random.split(key)
    x = jax.random.normal(kx, (N, C1, H, W), dtype=jnp.float32)
    w = jax.random.normal(kw, (C2, C1, k, k), dtype=jnp.float32) * 0.1
    gamma = jnp.ones((C2,), dtype=jnp.float32)   # BN weight (PyTorch default)
    beta = jnp.zeros((C2,), dtype=jnp.float32)   # BN bias (PyTorch default)

    fwd = jax.jit(functools.partial(conv_module_forward, k=k, s=s, p=p, d=d))
    out = jax.block_until_ready(fwd(x, w, gamma, beta))
    assert out.shape == (N, C2, H, W), out.shape

    # Reference on bf16-quantized inputs: the kernel feeds the MXU bf16
    # operands with f32 accumulation, so after matching the operand
    # quantization the comparison stays tight.
    xq = x.astype(jnp.bfloat16).astype(jnp.float32)
    wq = w.astype(jnp.bfloat16).astype(jnp.float32)
    ref = reference_forward(xq, wq, gamma, beta, k=k, s=s, p=p, d=d)
    np.testing.assert_allclose(np.asarray(out), np.asarray(ref),
                               rtol=5e-3, atol=5e-3)
    print("KERNEL_OK")
</pallas_src>

<mosaic_0001>
module attributes {stable_mosaic.version = 11 : i64} {
  func.func @conv_lrelu_stats_kernel(%arg0: i32, %arg1: i32, %arg2: i32, %arg3: memref<8x48xbf16, #tpu.memory_space<vmem>>, %arg4: memref<1x48x256xbf16, #tpu.memory_space<vmem>>, %arg5: memref<1x8x256xf32, #tpu.memory_space<vmem>>, %arg6: memref<1x1x8x1xf32, #tpu.memory_space<vmem>>, %arg7: memref<1x1x8x1xf32, #tpu.memory_space<vmem>>, %arg8: memref<8x256xf32, #tpu.memory_space<vmem>>) attributes {dimension_semantics = [#tpu.dimension_semantics<parallel>, #tpu.dimension_semantics<parallel>, #tpu.dimension_semantics<arbitrary>], iteration_bounds = array<i64: 2, 1, 1>, scalar_prefetch = 0 : i64, scratch_operands = 1 : i64, tpu.core_type = #tpu.core_type<tc>, window_params = [{transform_indices = @transform_0, window_bounds = array<i64: 8, 48>}, {transform_indices = @transform_1, window_bounds = array<i64: 1, 48, 256>}, {transform_indices = @transform_2, window_bounds = array<i64: 1, 8, 256>}, {transform_indices = @transform_3, window_bounds = array<i64: 1, 1, 8, 1>}, {transform_indices = @transform_4, window_bounds = array<i64: 1, 1, 8, 1>}]} {
    %c0_i32 = arith.constant 0 : i32
    %0 = arith.cmpi eq, %arg2, %c0_i32 : i32
    %1 = arith.extui %0 : i1 to i32
    %c0_i32_0 = arith.constant 0 : i32
    %2 = arith.cmpi ne, %1, %c0_i32_0 : i32
    scf.if %2 {
      %cst_11 = arith.constant 0.000000e+00 : f32
      %13 = vector.broadcast %cst_11 : f32 to vector<8x256xf32>
      %c0_12 = arith.constant 0 : index
      %c0_13 = arith.constant 0 : index
      %14 = vector.load %arg8[%c0_12, %c0_13] : memref<8x256xf32, #tpu.memory_space<vmem>>, vector<8x256xf32>
      tpu.vector_store %arg8[%c0_12, %c0_13], %13 {strides = array<i32>} : memref<8x256xf32, #tpu.memory_space<vmem>>, vector<8x256xf32>,
    } else {
    }
    %c0 = arith.constant 0 : index
    %c0_1 = arith.constant 0 : index
    %3 = vector.load %arg8[%c0, %c0_1] : memref<8x256xf32, #tpu.memory_space<vmem>>, vector<8x256xf32>
    %c0_2 = arith.constant 0 : index
    %c0_3 = arith.constant 0 : index
    %4 = vector.load %arg3[%c0_2, %c0_3] : memref<8x48xbf16, #tpu.memory_space<vmem>>, vector<8x48xbf16>
    %c0_4 = arith.constant 0 : index
    %c0_5 = arith.constant 0 : index
    %c0_6 = arith.constant 0 : index
    %5 = vector.load %arg4[%c0_4, %c0_5, %c0_6] : memref<1x48x256xbf16, #tpu.memory_space<vmem>>, vector<1x48x256xbf16>
    %6 = vector.shape_cast %5 : vector<1x48x256xbf16> to vector<48x256xbf16>
    %cst = arith.constant dense<0.000000e+00> : vector<8x256xf32>
    %7 = tpu.matmul %4, %6, %cst {dimension_numbers = #tpu.dot_dimension_numbers<[1], [0], [0], [1], [0, 0, 1, 1], [], []>} : vector<8x48xbf16>, vector<48x256xbf16>, vector<8x256xf32> -> vector<8x256xf32>
    %8 = arith.addf %3, %7 : vector<8x256xf32>
    %c0_7 = arith.constant 0 : index
    %c0_8 = arith.constant 0 : index
    %9 = vector.load %arg8[%c0_7, %c0_8] : memref<8x256xf32, #tpu.memory_space<vmem>>, vector<8x256xf32>
    tpu.vector_store %arg8[%c0_7, %c0_8], %8 {strides = array<i32>} : memref<8x256xf32, #tpu.memory_space<vmem>>, vector<8x256xf32>,
    %c0_i32_9 = arith.constant 0 : i32
    %10 = arith.cmpi eq, %arg2, %c0_i32_9 : i32
    %11 = arith.extui %10 : i1 to i32
    %c0_i32_10 = arith.constant 0 : i32
    %12 = arith.cmpi ne, %11, %c0_i32_10 : i32
    scf.if %12 {
      %c0_11 = arith.constant 0 : index
      %c0_12 = arith.constant 0 : index
      %13 = vector.load %arg8[%c0_11, %c0_12] : memref<8x256xf32, #tpu.memory_space<vmem>>, vector<8x256xf32>
      %cst_13 = arith.constant 0.000000e+00 : f32
      %14 = vector.broadcast %cst_13 : f32 to vector<8x256xf32>
      %15 = arith.cmpf oge, %13, %14 : vector<8x256xf32>
      %cst_14 = arith.constant 8.000000e+00 : f32
      %16 = vector.broadcast %cst_14 : f32 to vector<8x256xf32>
      %17 = arith.mulf %13, %16 : vector<8x256xf32>
      %18 = arith.select %15, %13, %17 : vector<8x256xi1>, vector<8x256xf32>
      %c0_15 = arith.constant 0 : index
      %c0_16 = arith.constant 0 : index
      %c0_17 = arith.constant 0 : index
      %19 = vector.load %arg5[%c0_15, %c0_16, %c0_17] : memref<1x8x256xf32, #tpu.memory_space<vmem>>, vector<1x8x256xf32>
      %20 = vector.shape_cast %19 : vector<1x8x256xf32> to vector<8x256xf32>
      %21 = vector.shape_cast %18 : vector<8x256xf32> to vector<1x8x256xf32>
      tpu.vector_store %arg5[%c0_15, %c0_16, %c0_17], %21 {strides = array<i32>} : memref<1x8x256xf32, #tpu.memory_space<vmem>>, vector<1x8x256xf32>,
      %cst_18 = arith.constant dense<0.000000e+00> : vector<8xf32>
      %22 = vector.multi_reduction <add>, %18, %cst_18 [1] : vector<8x256xf32> to vector<8xf32>
      %23 = vector.shape_cast %22 : vector<8xf32> to vector<8x1xf32>
      %c0_19 = arith.constant 0 : index
      %c0_20 = arith.constant 0 : index
      %c0_21 = arith.constant 0 : index
      %c0_22 = arith.constant 0 : index
      %24 = vector.load %arg6[%c0_19, %c0_20, %c0_21, %c0_22] : memref<1x1x8x1xf32, #tpu.memory_space<vmem>>, vector<1x1x8x1xf32>
      %25 = vector.shape_cast %24 : vector<1x1x8x1xf32> to vector<8x1xf32>
      %26 = vector.shape_cast %23 : vector<8x1xf32> to vector<1x1x8x1xf32>
      tpu.vector_store %arg6[%c0_19, %c0_20, %c0_21, %c0_22], %26 {strides = array<i32>} : memref<1x1x8x1xf32, #tpu.memory_space<vmem>>, vector<1x1x8x1xf32>,
      %27 = arith.mulf %18, %18 : vector<8x256xf32>
      %cst_23 = arith.constant dense<0.000000e+00> : vector<8xf32>
      %28 = vector.multi_reduction <add>, %27, %cst_23 [1] : vector<8x256xf32> to vector<8xf32>
      %29 = vector.shape_cast %28 : vector<8xf32> to vector<8x1xf32>
      %c0_24 = arith.constant 0 : index
      %c0_25 = arith.constant 0 : index
      %c0_26 = arith.constant 0 : index
      %c0_27 = arith.constant 0 : index
      %30 = vector.load %arg7[%c0_24, %c0_25, %c0_26, %c0_27] : memref<1x1x8x1xf32, #tpu.memory_space<vmem>>, vector<1x1x8x1xf32>
      %31 = vector.shape_cast %30 : vector<1x1x8x1xf32> to vector<8x1xf32>
      %32 = vector.shape_cast %29 : vector<8x1xf32> to vector<1x1x8x1xf32>
      tpu.vector_store %arg7[%c0_24, %c0_25, %c0_26, %c0_27], %32 {strides = array<i32>} : memref<1x1x8x1xf32, #tpu.memory_space<vmem>>, vector<1x1x8x1xf32>,
    } else {
    }
    return
  }
  func.func @transform_0(%arg0: i32, %arg1: i32, %arg2: i32) -> (i32, i32) {
    %c0_i32 = arith.constant 0 : i32
    %c0_i32_0 = arith.constant 0 : i32
    return %c0_i32, %arg2 : i32, i32
  }
  func.func @transform_1(%arg0: i32, %arg1: i32, %arg2: i32) -> (i32, i32, i32) {
    %c0_i32 = arith.constant 0 : i32
    return %arg0, %arg2, %arg1 : i32, i32, i32
  }
  func.func @transform_2(%arg0: i32, %arg1: i32, %arg2: i32) -> (i32, i32, i32) {
    %c0_i32 = arith.constant 0 : i32
    %c0_i32_0 = arith.constant 0 : i32
    return %arg0, %c0_i32, %arg1 : i32, i32, i32
  }
  func.func @transform_3(%arg0: i32, %arg1: i32, %arg2: i32) -> (i32, i32, i32, i32) {
    %c0_i32 = arith.constant 0 : i32
    %c0_i32_0 = arith.constant 0 : i32
    %c0_i32_1 = arith.constant 0 : i32
    return %arg0, %arg1, %c0_i32, %c0_i32_0 : i32, i32, i32, i32
  }
  func.func @transform_4(%arg0: i32, %arg1: i32, %arg2: i32) -> (i32, i32, i32, i32) {
    %c0_i32 = arith.constant 0 : i32
    %c0_i32_0 = arith.constant 0 : i32
    %c0_i32_1 = arith.constant 0 : i32
    return %arg0, %arg1, %c0_i32, %c0_i32_0 : i32, i32, i32, i32
  }
}

module attributes {stable_mosaic.version = 11 : i64} {
  func.func @bn_apply_kernel(%arg0: i32, %arg1: i32, %arg2: memref<1x8x256xf32, #tpu.memory_space<vmem>>, %arg3: memref<8x1xf32, #tpu.memory_space<vmem>>, %arg4: memref<8x1xf32, #tpu.memory_space<vmem>>, %arg5: memref<1x8x256xf32, #tpu.memory_space<vmem>>) attributes {dimension_semantics = [#tpu.dimension_semantics<parallel>, #tpu.dimension_semantics<parallel>], iteration_bounds = array<i64: 2, 1>, scalar_prefetch = 0 : i64, scratch_operands = 0 : i64, tpu.core_type = #tpu.core_type<tc>, window_params = [{transform_indices = @transform_0, window_bounds = array<i64: 1, 8, 256>}, {pipeline_mode = #tpu.pipeline_mode<synchronous>, transform_indices = @transform_1, window_bounds = array<i64: 8, 1>}, {pipeline_mode = #tpu.pipeline_mode<synchronous>, transform_indices = @transform_2, window_bounds = array<i64: 8, 1>}, {transform_indices = @transform_3, window_bounds = array<i64: 1, 8, 256>}]} {
    %c0 = arith.constant 0 : index
    %c0_0 = arith.constant 0 : index
    %c0_1 = arith.constant 0 : index
    %0 = vector.load %arg2[%c0, %c0_0, %c0_1] : memref<1x8x256xf32, #tpu.memory_space<vmem>>, vector<1x8x256xf32>
    %1 = vector.shape_cast %0 : vector<1x8x256xf32> to vector<8x256xf32>
    %c0_2 = arith.constant 0 : index
    %c0_3 = arith.constant 0 : index
    %2 = vector.load %arg3[%c0_2, %c0_3] : memref<8x1xf32, #tpu.memory_space<vmem>>, vector<8x1xf32>
    %3 = vector.broadcast %2 : vector<8x1xf32> to vector<8x256xf32>
    %4 = arith.mulf %1, %3 : vector<8x256xf32>
    %c0_4 = arith.constant 0 : index
    %c0_5 = arith.constant 0 : index
    %5 = vector.load %arg4[%c0_4, %c0_5] : memref<8x1xf32, #tpu.memory_space<vmem>>, vector<8x1xf32>
    %6 = vector.broadcast %5 : vector<8x1xf32> to vector<8x256xf32>
    %7 = arith.addf %4, %6 : vector<8x256xf32>
    %c0_6 = arith.constant 0 : index
    %c0_7 = arith.constant 0 : index
    %c0_8 = arith.constant 0 : index
    %8 = vector.load %arg5[%c0_6, %c0_7, %c0_8] : memref<1x8x256xf32, #tpu.memory_space<vmem>>, vector<1x8x256xf32>
    %9 = vector.shape_cast %8 : vector<1x8x256xf32> to vector<8x256xf32>
    %10 = vector.shape_cast %7 : vector<8x256xf32> to vector<1x8x256xf32>
    tpu.vector_store %arg5[%c0_6, %c0_7, %c0_8], %10 {strides = array<i32>} : memref<1x8x256xf32, #tpu.memory_space<vmem>>, vector<1x8x256xf32>,
    return
  }
  func.func @transform_0(%arg0: i32, %arg1: i32) -> (i32, i32, i32) {
    %c0_i32 = arith.constant 0 : i32
    %c0_i32_0 = arith.constant 0 : i32
    return %arg0, %c0_i32, %arg1 : i32, i32, i32
  }
  func.func @transform_1(%arg0: i32, %arg1: i32) -> (i32, i32) {
    %c0_i32 = arith.constant 0 : i32
    %c0_i32_0 = arith.constant 0 : i32
    %c0_i32_1 = arith.constant 0 : i32
    return %c0_i32, %c0_i32_0 : i32, i32
  }
  func.func @transform_2(%arg0: i32, %arg1: i32) -> (i32, i32) {
    %c0_i32 = arith.constant 0 : i32
    %c0_i32_0 = arith.constant 0 : i32
    %c0_i32_1 = arith.constant 0 : i32
    return %c0_i32, %c0_i32_0 : i32, i32
  }
  func.func @transform_3(%arg0: i32, %arg1: i32) -> (i32, i32, i32) {
    %c0_i32 = arith.constant 0 : i32
    %c0_i32_0 = arith.constant 0 : i32
    return %arg0, %c0_i32, %arg1 : i32, i32, i32
  }
}

</mosaic_0001>

<llo_original>
// kernel: conv_module_forward.3
$region0: #{conv_module_forward.3}
  #allocation0 [shape = 'u32[]', space=smem, size = 0x4, offset = 0x4, fixed_abs, tag = 'smem constant byte address 0x4 - core index']
  #allocation1 [shape = 'u32[144,128]{1,0:T(1,128)}', space=vmem, size = 0x12000, scoped, tag = 'internal scratch']
  %s0 = inlined_call_operand.vmem [shape: f32[2,8,256], index: 0, kind: input, shape index: {}, may-alias: {0,3}]
  %s1 = inlined_call_operand.vmem [shape: f32[8,1], index: 1, kind: input, shape index: {}]
  %s2 = inlined_call_operand.vmem [shape: f32[8,1], index: 2, kind: input, shape index: {}]
  %s3 = inlined_call_operand.vmem [shape: f32[2,8,256], index: 3, kind: output, shape index: {}, may-alias: {0,3}]
  %s4 = sld [smem:[#allocation0]]
  $region45: #{conv_module_forward.3} parent=0
    _
  %s6 = ssub.s32 1, %s4
  %s7 = scalar_select 0, %s6, %s4
  loop: start=0, step=1, limit=4
  $region2: #{conv_module_forward.3} parent=0 // loop_pre_header
    _
  $region3: #{conv_module_forward.3} parent=0 // loop_header
    %s9 = sphi 0, %s13
    %p10 = scmp.ge.s32.totalorder %s9, 4
    %s16 = sphi 0, %s28
    %s17 = sphi 0, %s24
    %s18 = sphi 0, %s16
    %s19 = sphi 0, %s17
    %s20 = sphi 0, %s18
    %s21 = sphi 0, %s19
    %s33 = sphi 0, %s35
    %s36 = sphi 0, %s33
    %s37 = sphi 0, %s36
    %s53 = sphi 0, %s37
    %s57 = sphi 0, %s57
    %s59 = sphi 0, %s57
    %s60 = sphi 0, %s59
    %s74 = sphi 0, %s60
    %s78 = sphi 0, %s78
    %s80 = sphi 0, %s78
    %s81 = sphi 0, %s80
    %s95 = sphi 0, %s81
    %s103 = sphi 0, %s105
    %s106 = sphi 0, %s103
    %s107 = sphi 0, %s106
    %s123 = sphi 0, %s107
  $region4: #{conv_module_forward.3} parent=0 // loop_header_branch
    %12 = sbr.rel (%p10) target = $region8
  $region5: #{conv_module_forward.3} parent=0 // loop_body
    %s14 = ssub.s32 %s9, 1
    %s15 = ssub.s32 %s9, 2
    %s22 = sadd.s32 1, %s17
    %p23 = scmp.ge.s32.totalorder %s22, 1
    %s24 = scalar_select %p23, 0, %s22
    %s25 = sadd.s32 1, %s16
    %s26 = scalar_select %p23, %s25, %s16
    %p27 = scmp.ge.s32.totalorder %s26, 2
    %s28 = scalar_select %p27, 0, %s26
    %s29 = ssub.s32 %s16, %s28
    %s30 = ssub.s32 %s17, %s24
    %s31 = sor.u32 %s29, %s30
    %p32 = scmp.eq.s32.totalorder %s31, 0
    %s34 = sadd.s32 %s33, 1
    %s35 = scalar_select %p32, %s33, %s34
    %p38 = pneg %p32
    %p39 = scmp.eq.s32.totalorder %s9, 1
    %p40 = por %p38, %p39
    %p41 = scmp.ne.s32.totalorder %s33, %s36
    %p42 = scmp.eq.s32.totalorder %s9, 0
    %p43 = por %p41, %p42
    %p44 = scmp.ne.s32.totalorder %s33, %s36
    %p45 = scmp.eq.s32.totalorder %s14, 1
    %p46 = por %p44, %p45
    %p47 = scmp.ne.s32.totalorder %s36, %s37
    %p48 = scmp.eq.s32.totalorder %s14, 0
    %p49 = por %p47, %p48
    %p50 = scmp.ne.s32.totalorder %s36, %s37
    %p51 = scmp.eq.s32.totalorder %s15, 1
    %p52 = por %p50, %p51
    %p54 = scmp.ne.s32.totalorder %s37, %s53
    %p55 = scmp.eq.s32.totalorder %s15, 0
    %p56 = por %p54, %p55
    %s58 = sadd.s32 %s57, 1
    %p61 = scmp.eq.s32.totalorder %s9, 1
    %p62 = scmp.ne.s32.totalorder %s57, %s59
    %p63 = scmp.eq.s32.totalorder %s9, 0
    %p64 = por %p62, %p63
    %p65 = scmp.ne.s32.totalorder %s57, %s59
    %p66 = scmp.eq.s32.totalorder %s14, 1
    %p67 = por %p65, %p66
    %p68 = scmp.ne.s32.totalorder %s59, %s60
    %p69 = scmp.eq.s32.totalorder %s14, 0
    %p70 = por %p68, %p69
    %p71 = scmp.ne.s32.totalorder %s59, %s60
    %p72 = scmp.eq.s32.totalorder %s15, 1
    %p73 = por %p71, %p72
    %p75 = scmp.ne.s32.totalorder %s60, %s74
    %p76 = scmp.eq.s32.totalorder %s15, 0
    %p77 = por %p75, %p76
    %s79 = sadd.s32 %s78, 1
    %p82 = scmp.eq.s32.totalorder %s9, 1
    %p83 = scmp.ne.s32.totalorder %s78, %s80
    %p84 = scmp.eq.s32.totalorder %s9, 0
    %p85 = por %p83, %p84
    %p86 = scmp.ne.s32.totalorder %s78, %s80
    %p87 = scmp.eq.s32.totalorder %s14, 1
    %p88 = por %p86, %p87
    %p89 = scmp.ne.s32.totalorder %s80, %s81
    %p90 = scmp.eq.s32.totalorder %s14, 0
    %p91 = por %p89, %p90
    %p92 = scmp.ne.s32.totalorder %s80, %s81
    %p93 = scmp.eq.s32.totalorder %s15, 1
    %p94 = por %p92, %p93
    %p96 = scmp.ne.s32.totalorder %s81, %s95
    %p97 = scmp.eq.s32.totalorder %s15, 0
    %p98 = por %p96, %p97
    %s99 = ssub.s32 %s16, %s28
    %s100 = ssub.s32 %s17, %s24
    %s101 = sor.u32 %s99, %s100
    %p102 = scmp.eq.s32.totalorder %s101, 0
    %s104 = sadd.s32 %s103, 1
    %s105 = scalar_select %p102, %s103, %s104
    %p108 = pneg %p102
    %p109 = scmp.eq.s32.totalorder %s9, 1
    %p110 = por %p108, %p109
    %p111 = scmp.ne.s32.totalorder %s103, %s106
    %p112 = scmp.eq.s32.totalorder %s9, 0
    %p113 = por %p111, %p112
    %p114 = scmp.ne.s32.totalorder %s103, %s106
    %p115 = scmp.eq.s32.totalorder %s14, 1
    %p116 = por %p114, %p115
    %p117 = scmp.ne.s32.totalorder %s106, %s107
    %p118 = scmp.eq.s32.totalorder %s14, 0
    %p119 = por %p117, %p118
    %p120 = scmp.ne.s32.totalorder %s106, %s107
    %p121 = scmp.eq.s32.totalorder %s15, 1
    %p122 = por %p120, %p121
    %p124 = scmp.ne.s32.totalorder %s107, %s123
    %p125 = scmp.eq.s32.totalorder %s15, 0
    %p126 = por %p124, %p125
    %p127 = scmp.le.s32.totalorder 1, %s9
    %p128 = scmp.lt.s32.totalorder %s9, 3
    %p129 = pnand %p127, %p128
    %p130 = pneg %p129
    // Predicated region
    $region9: #{conv_module_forward.3} parent=5 // pred_check
      _
    $region10: #{conv_module_forward.3} parent=5 // pred_check_branch
      %132 = sbr.rel (%p129) target = $region12
    $region11: #{conv_module_forward.3} parent=5 // pred_region
      %s133 = ssub.s32 %s9, 1
      // Predicated region
      $region13: #{conv_module_forward.3} parent=11 // pred_check
        %p134 = pneg %p70
      $region14: #{conv_module_forward.3} parent=11 // pred_check_branch
        %136 = sbr.rel (%p134) target = $region16
      $region15: #{conv_module_forward.3} parent=11 // pred_region
        _
      $region16: #{conv_module_forward.3} parent=11 // pred_fallthru
        _
      // Predicated region
      $region17: #{conv_module_forward.3} parent=11 // pred_check
        %p137 = pneg %p91
      $region18: #{conv_module_forward.3} parent=11 // pred_check_branch
        %139 = sbr.rel (%p137) target = $region20
      $region19: #{conv_module_forward.3} parent=11 // pred_region
        _
      $region20: #{conv_module_forward.3} parent=11 // pred_fallthru
        _
    $region12: #{conv_module_forward.3} parent=5 // pred_fallthru
      _
    %p140 = scmp.lt.s32.totalorder %s9, 2
    // Predicated region
    $region21: #{conv_module_forward.3} parent=5 // pred_check
      %p141 = pneg %p140
    $region22: #{conv_module_forward.3} parent=5 // pred_check_branch
      %143 = sbr.rel (%p141) target = $region24
    $region23: #{conv_module_forward.3} parent=5 // pred_region
      // Predicated region
      $region25: #{conv_module_forward.3} parent=23 // pred_check
        %p144 = pneg %p43
      $region26: #{conv_module_forward.3} parent=23 // pred_check_branch
        %146 = sbr.rel (%p144) target = $region28
      $region27: #{conv_module_forward.3} parent=23 // pred_region
        %s147 = smul.u32 2, %s17
        %p148 = scmp.lt.s32.totalorder %s16, 1
        %s149 = scalar_select %p148, %s16, 1
        %p150 = scmp.lt.s32.totalorder %s147, 1
        %s151 = scalar_select %p150, %s147, 1
        %s152 = smul.addr %s149, 2
        %s153 = sadd.s32 %s151, %s152
        %s154 = smul.addr %s153, 8
        %s155 = scalar_lea.vmem %s0, %s154
        %s156 = smul.u32 2, %s17
      $region28: #{conv_module_forward.3} parent=23 // pred_fallthru
        _
    $region24: #{conv_module_forward.3} parent=5 // pred_fallthru
      _
    %p157 = scmp.le.s32.totalorder 1, %s9
    %p158 = scmp.lt.s32.totalorder %s9, 3
    %p159 = pnand %p157, %p158
    %p160 = pneg %p159
    // Predicated region
    $region29: #{conv_module_forward.3} parent=5 // pred_check
      _
    $region30: #{conv_module_forward.3} parent=5 // pred_check_branch
      %162 = sbr.rel (%p159) target = $region32
    $region31: #{conv_module_forward.3} parent=5 // pred_region
      %s163 = ssub.s32 %s9, 1
      %s164 = smul.u32 2, %s19
      %p165 = scmp.lt.s32.totalorder %s18, 1
      %s166 = scalar_select %p165, %s18, 1
      %p167 = scmp.lt.s32.totalorder %s164, 1
      %s168 = scalar_select %p167, %s164, 1
      %s169 = smul.addr %s166, 2
      %s170 = sadd.s32 %s168, %s169
      %s171 = smul.addr %s170, 8
      %s172 = scalar_lea.vmem %s0, %s171
      %p173 = pneg %p49
      %p174 = pneg %p46
      %p175 = pneg %p70
      %p176 = pneg %p67
      %p177 = pneg %p91
      %p178 = pneg %p88
      %p179 = pneg %p119
      %p180 = pneg %p116
      %s181 = smul.u32 2, %s19
      %p182 = scmp.lt.s32.totalorder %s18, 1
      %s183 = scalar_select %p182, %s18, 1
      %p184 = scmp.lt.s32.totalorder %s181, 1
      %s185 = scalar_select %p184, %s181, 1
      %s186 = smul.addr %s183, 2
      %s187 = sadd.s32 %s185, %s186
      %s188 = smul.addr %s187, 8
      %s189 = scalar_lea.vmem %s3, %s188
      %s190 = smul.u32 2, %s19
      %p191 = scmp.lt.s32.totalorder %s18, 1
      %s192 = scalar_select %p191, %s18, 1
      %p193 = scmp.lt.s32.totalorder %s190, 1
      %s194 = scalar_select %p193, %s190, 1
      %s195 = smul.addr %s192, 2
      %s196 = sadd.s32 %s194, %s195
      %s197 = smul.addr %s196, 8
      %s198 = scalar_lea.vmem %s0, %s197
      %s199 = smul.u32 2, %s19
      %s200 = smul.u32 2, %s19
      %p201 = scmp.lt.s32.totalorder %s18, 1
      %s202 = scalar_select %p201, %s18, 1
      %p203 = scmp.lt.s32.totalorder %s200, 1
      %s204 = scalar_select %p203, %s200, 1
      %s205 = smul.addr %s202, 2
      %s206 = sadd.s32 %s204, %s205
      %s207 = smul.addr %s206, 8
      %s208 = scalar_lea.vmem %s3, %s207
      %s209 = smul.u32 2, %s19
      %v210 = vld [vmem:[%s198] sm:$0xff]
      %v211 = vld [vmem:[%s198 + $0x8] sm:$0xff]
      %v212 = vld [vmem:[%s1] sm:$0xff]
      %214 = vset.pattern.permute.xlu0 0
      %215 = vperm.xlu0 %214, %v212
      %v216 = vpop.permute.xlu0 %215
      %v218 = vmul.f32 %v210, %v216
      %v219 = vmul.f32 %v211, %v216
      %v220 = vld [vmem:[%s2] sm:$0xff]
      %222 = vset.pattern.permute.xlu0 0
      %223 = vperm.xlu0 %222, %v220
      %v224 = vpop.permute.xlu0 %223
      %v226 = vadd.f32 %v218, %v224
      %v227 = vadd.f32 %v219, %v224
      %228 = vst [vmem:[%s208] sm:$0xff] %v226
      %229 = vst [vmem:[%s208 + $0x8] sm:$0xff] %v227
      %s230 = smul.u32 2, %s19
      %p231 = scmp.lt.s32.totalorder %s18, 1
      %s232 = scalar_select %p231, %s18, 1
      %p233 = scmp.lt.s32.totalorder %s230, 1
      %s234 = scalar_select %p233, %s230, 1
      %s235 = smul.addr %s232, 2
      %s236 = sadd.s32 %s234, %s235
      %s237 = smul.addr %s236, 8
      %s238 = scalar_lea.vmem %s3, %s237
      // Predicated region
      $region33: #{conv_module_forward.3} parent=31 // pred_check
        %p239 = pneg %p116
      $region34: #{conv_module_forward.3} parent=31 // pred_check_branch
        %241 = sbr.rel (%p239) target = $region36
      $region35: #{conv_module_forward.3} parent=31 // pred_region
        %s242 = smul.u32 2, %s19
      $region36: #{conv_module_forward.3} parent=31 // pred_fallthru
        _
    $region32: #{conv_module_forward.3} parent=5 // pred_fallthru
      _
    %p243 = scmp.le.s32.totalorder 2, %s9
    // Predicated region
    $region37: #{conv_module_forward.3} parent=5 // pred_check
      %p244 = pneg %p243
    $region38: #{conv_module_forward.3} parent=5 // pred_check_branch
      %246 = sbr.rel (%p244) target = $region40
    $region39: #{conv_module_forward.3} parent=5 // pred_region
      %s247 = ssub.s32 %s9, 2
      // Predicated region
      $region41: #{conv_module_forward.3} parent=39 // pred_check
        %p248 = pneg %p122
      $region42: #{conv_module_forward.3} parent=39 // pred_check_branch
        %250 = sbr.rel (%p248) target = $region44
      $region43: #{conv_module_forward.3} parent=39 // pred_region
        %s251 = smul.u32 2, %s21
        %p252 = scmp.lt.s32.totalorder %s20, 1
        %s253 = scalar_select %p252, %s20, 1
        %p254 = scmp.lt.s32.totalorder %s251, 1
        %s255 = scalar_select %p254, %s251, 1
        %s256 = smul.addr %s253, 2
        %s257 = sadd.s32 %s255, %s256
        %s258 = smul.addr %s257, 8
        %s259 = scalar_lea.vmem %s3, %s258
      $region44: #{conv_module_forward.3} parent=39 // pred_fallthru
        _
    $region40: #{conv_module_forward.3} parent=5 // pred_fallthru
      _
  $region6: #{conv_module_forward.3} parent=0 // loop_footer
    %s13 = sadd.s32 1, %s9
  $region7: #{conv_module_forward.3} parent=0 // loop_footer_branch
    %8 = sbr.rel target = $region3
  $region8: #{conv_module_forward.3} parent=0 // loop_exit
    _

// kernel: conv_module_forward.2
$region0: #{conv_module_forward.2}
  #allocation0 [shape = 'u32[]', space=smem, size = 0x4, offset = 0x4, fixed_abs, tag = 'smem constant byte address 0x4 - core index']
  #allocation1 [shape = 'u32[144,128]{1,0:T(1,128)}', space=vmem, size = 0x12000, scoped, tag = 'internal scratch']
  #allocation2 [shape = 'f32[8,256]{1,0:T(8,128)}', space=vmem, size = 0x2000, scoped, tag = 'scratch operand']
  %s0 = inlined_call_operand.vmem [shape: bf16[8,48], index: 0, kind: input, shape index: {}]
  %s1 = inlined_call_operand.vmem [shape: bf16[2,48,256], index: 1, kind: input, shape index: {}]
  %s2 = inlined_call_operand.vmem [shape: f32[2,8,256], index: 2, kind: output, shape index: {0}]
  %s3 = inlined_call_operand.vmem [shape: f32[2,1,8,1], index: 3, kind: output, shape index: {1}]
  %s4 = inlined_call_operand.vmem [shape: f32[2,1,8,1], index: 4, kind: output, shape index: {2}]
  %5 = xla_tuple %s2, %s3, %s4
  %s6 = sld [smem:[#allocation0]]
  $region65: #{conv_module_forward.2} parent=0
    _
  %s8 = ssub.s32 1, %s6
  %s9 = scalar_select 0, %s8, %s6
  loop: start=0, step=1, limit=4
  $region2: #{conv_module_forward.2} parent=0 // loop_pre_header
    _
  $region3: #{conv_module_forward.2} parent=0 // loop_header
    %s11 = sphi 0, %s15
    %p12 = scmp.ge.s32.totalorder %s11, 4
    %s18 = sphi 0, %s37
    %s19 = sphi 0, %s33
    %s20 = sphi 0, %s29
    %s21 = sphi 0, %s18
    %s22 = sphi 0, %s19
    %s23 = sphi 0, %s20
    %s24 = sphi 0, %s21
    %s25 = sphi 0, %s22
    %s26 = sphi 0, %s23
    %s40 = sphi 0, %s42
    %s43 = sphi 0, %s40
    %s44 = sphi 0, %s43
    %s60 = sphi 0, %s44
    %s70 = sphi 0, %s72
    %s73 = sphi 0, %s70
    %s74 = sphi 0, %s73
    %s90 = sphi 0, %s74
    %s98 = sphi 0, %s100
    %s101 = sphi 0, %s98
    %s102 = sphi 0, %s101
    %s118 = sphi 0, %s102
    %s126 = sphi 0, %s128
    %s129 = sphi 0, %s126
    %s130 = sphi 0, %s129
    %s146 = sphi 0, %s130
    %s154 = sphi 0, %s156
    %s157 = sphi 0, %s154
    %s158 = sphi 0, %s157
    %s174 = sphi 0, %s158
  $region4: #{conv_module_forward.2} parent=0 // loop_header_branch
    %14 = sbr.rel (%p12) target = $region8
  $region5: #{conv_module_forward.2} parent=0 // loop_body
    %s16 = ssub.s32 %s11, 1
    %s17 = ssub.s32 %s11, 2
    %s27 = sadd.s32 1, %s20
    %p28 = scmp.ge.s32.totalorder %s27, 1
    %s29 = scalar_select %p28, 0, %s27
    %s30 = sadd.s32 1, %s19
    %s31 = scalar_select %p28, %s30, %s19
    %p32 = scmp.ge.s32.totalorder %s31, 1
    %s33 = scalar_select %p32, 0, %s31
    %s34 = sadd.s32 1, %s18
    %s35 = scalar_select %p32, %s34, %s18
    %p36 = scmp.ge.s32.totalorder %s35, 2
    %s37 = scalar_select %p36, 0, %s35
    %s38 = ssub.s32 %s20, %s29
    %p39 = scmp.eq.s32.totalorder %s38, 0
    %s41 = sadd.s32 %s40, 1
    %s42 = scalar_select %p39, %s40, %s41
    %p45 = pneg %p39
    %p46 = scmp.eq.s32.totalorder %s11, 1
    %p47 = por %p45, %p46
    %p48 = scmp.ne.s32.totalorder %s40, %s43
    %p49 = scmp.eq.s32.totalorder %s11, 0
    %p50 = por %p48, %p49
    %p51 = scmp.ne.s32.totalorder %s40, %s43
    %p52 = scmp.eq.s32.totalorder %s16, 1
    %p53 = por %p51, %p52
    %p54 = scmp.ne.s32.totalorder %s43, %s44
    %p55 = scmp.eq.s32.totalorder %s16, 0
    %p56 = por %p54, %p55
    %p57 = scmp.ne.s32.totalorder %s43, %s44
    %p58 = scmp.eq.s32.totalorder %s17, 1
    %p59 = por %p57, %p58
    %p61 = scmp.ne.s32.totalorder %s44, %s60
    %p62 = scmp.eq.s32.totalorder %s17, 0
    %p63 = por %p61, %p62
    %s64 = ssub.s32 %s18, %s37
    %s65 = ssub.s32 %s20, %s29
    %s66 = sor.u32 %s64, %s65
    %s67 = ssub.s32 %s19, %s33
    %s68 = sor.u32 %s66, %s67
    %p69 = scmp.eq.s32.totalorder %s68, 0
    %s71 = sadd.s32 %s70, 1
    %s72 = scalar_select %p69, %s70, %s71
    %p75 = pneg %p69
    %p76 = scmp.eq.s32.totalorder %s11, 1
    %p77 = por %p75, %p76
    %p78 = scmp.ne.s32.totalorder %s70, %s73
    %p79 = scmp.eq.s32.totalorder %s11, 0
    %p80 = por %p78, %p79
    %p81 = scmp.ne.s32.totalorder %s70, %s73
    %p82 = scmp.eq.s32.totalorder %s16, 1
    %p83 = por %p81, %p82
    %p84 = scmp.ne.s32.totalorder %s73, %s74
    %p85 = scmp.eq.s32.totalorder %s16, 0
    %p86 = por %p84, %p85
    %p87 = scmp.ne.s32.totalorder %s73, %s74
    %p88 = scmp.eq.s32.totalorder %s17, 1
    %p89 = por %p87, %p88
    %p91 = scmp.ne.s32.totalorder %s74, %s90
    %p92 = scmp.eq.s32.totalorder %s17, 0
    %p93 = por %p91, %p92
    %s94 = ssub.s32 %s18, %s37
    %s95 = ssub.s32 %s19, %s33
    %s96 = sor.u32 %s94, %s95
    %p97 = scmp.eq.s32.totalorder %s96, 0
    %s99 = sadd.s32 %s98, 1
    %s100 = scalar_select %p97, %s98, %s99
    %p103 = pneg %p97
    %p104 = scmp.eq.s32.totalorder %s11, 1
    %p105 = por %p103, %p104
    %p106 = scmp.ne.s32.totalorder %s98, %s101
    %p107 = scmp.eq.s32.totalorder %s11, 0
    %p108 = por %p106, %p107
    %p109 = scmp.ne.s32.totalorder %s98, %s101
    %p110 = scmp.eq.s32.totalorder %s16, 1
    %p111 = por %p109, %p110
    %p112 = scmp.ne.s32.totalorder %s101, %s102
    %p113 = scmp.eq.s32.totalorder %s16, 0
    %p114 = por %p112, %p113
    %p115 = scmp.ne.s32.totalorder %s101, %s102
    %p116 = scmp.eq.s32.totalorder %s17, 1
    %p117 = por %p115, %p116
    %p119 = scmp.ne.s32.totalorder %s102, %s118
    %p120 = scmp.eq.s32.totalorder %s17, 0
    %p121 = por %p119, %p120
    %s122 = ssub.s32 %s18, %s37
    %s123 = ssub.s32 %s19, %s33
    %s124 = sor.u32 %s122, %s123
    %p125 = scmp.eq.s32.totalorder %s124, 0
    %s127 = sadd.s32 %s126, 1
    %s128 = scalar_select %p125, %s126, %s127
    %p131 = pneg %p125
    %p132 = scmp.eq.s32.totalorder %s11, 1
    %p133 = por %p131, %p132
    %p134 = scmp.ne.s32.totalorder %s126, %s129
    %p135 = scmp.eq.s32.totalorder %s11, 0
    %p136 = por %p134, %p135
    %p137 = scmp.ne.s32.totalorder %s126, %s129
    %p138 = scmp.eq.s32.totalorder %s16, 1
    %p139 = por %p137, %p138
    %p140 = scmp.ne.s32.totalorder %s129, %s130
    %p141 = scmp.eq.s32.totalorder %s16, 0
    %p142 = por %p140, %p141
    %p143 = scmp.ne.s32.totalorder %s129, %s130
    %p144 = scmp.eq.s32.totalorder %s17, 1
    %p145 = por %p143, %p144
    %p147 = scmp.ne.s32.totalorder %s130, %s146
    %p148 = scmp.eq.s32.totalorder %s17, 0
    %p149 = por %p147, %p148
    %s150 = ssub.s32 %s18, %s37
    %s151 = ssub.s32 %s19, %s33
    %s152 = sor.u32 %s150, %s151
    %p153 = scmp.eq.s32.totalorder %s152, 0
    %s155 = sadd.s32 %s154, 1
    %s156 = scalar_select %p153, %s154, %s155
    %p159 = pneg %p153
    %p160 = scmp.eq.s32.totalorder %s11, 1
    %p161 = por %p159, %p160
    %p162 = scmp.ne.s32.totalorder %s154, %s157
    %p163 = scmp.eq.s32.totalorder %s11, 0
    %p164 = por %p162, %p163
    %p165 = scmp.ne.s32.totalorder %s154, %s157
    %p166 = scmp.eq.s32.totalorder %s16, 1
    %p167 = por %p165, %p166
    %p168 = scmp.ne.s32.totalorder %s157, %s158
    %p169 = scmp.eq.s32.totalorder %s16, 0
    %p170 = por %p168, %p169
    %p171 = scmp.ne.s32.totalorder %s157, %s158
    %p172 = scmp.eq.s32.totalorder %s17, 1
    %p173 = por %p171, %p172
    %p175 = scmp.ne.s32.totalorder %s158, %s174
    %p176 = scmp.eq.s32.totalorder %s17, 0
    %p177 = por %p175, %p176
    %p178 = scmp.le.s32.totalorder 1, %s11
    %p179 = scmp.lt.s32.totalorder %s11, 3
    %p180 = pnand %p178, %p179
    %p181 = pneg %p180
    // Predicated region
    $region9: #{conv_module_forward.2} parent=5 // pred_check
      _
    $region10: #{conv_module_forward.2} parent=5 // pred_check_branch
      %183 = sbr.rel (%p180) target = $region12
    $region11: #{conv_module_forward.2} parent=5 // pred_region
      %s184 = ssub.s32 %s11, 1
      // Predicated region
      $region13: #{conv_module_forward.2} parent=11 // pred_check
        %p185 = pneg %p56
      $region14: #{conv_module_forward.2} parent=11 // pred_check_branch
        %187 = sbr.rel (%p185) target = $region16
      $region15: #{conv_module_forward.2} parent=11 // pred_region
        %p188 = scmp.lt.s32.totalorder %s23, 0
        %s189 = scalar_select %p188, %s23, 0
        %s190 = smul.addr %s189, 4
        %s191 = scalar_lea.vmem %s0, %s190
      $region16: #{conv_module_forward.2} parent=11 // pred_fallthru
        _
    $region12: #{conv_module_forward.2} parent=5 // pred_fallthru
      _
    %p192 = scmp.lt.s32.totalorder %s11, 2
    // Predicated region
    $region17: #{conv_module_forward.2} parent=5 // pred_check
      %p193 = pneg %p192
    $region18: #{conv_module_forward.2} parent=5 // pred_check_branch
      %195 = sbr.rel (%p193) target = $region20
    $region19: #{conv_module_forward.2} parent=5 // pred_region
      // Predicated region
      $region21: #{conv_module_forward.2} parent=19 // pred_check
        %p196 = pneg %p80
      $region22: #{conv_module_forward.2} parent=19 // pred_check_branch
        %198 = sbr.rel (%p196) target = $region24
      $region23: #{conv_module_forward.2} parent=19 // pred_region
        %s199 = smul.u32 6, %s20
        %s200 = smul.u32 2, %s19
        %p201 = scmp.lt.s32.totalorder %s18, 1
        %s202 = scalar_select %p201, %s18, 1
        %p203 = scmp.lt.s32.totalorder %s199, 5
        %s204 = scalar_select %p203, %s199, 5
        %p205 = scmp.lt.s32.totalorder %s200, 1
        %s206 = scalar_select %p205, %s200, 1
        %s207 = smul.addr %s204, 2
        %s208 = sadd.s32 %s206, %s207
        %s209 = smul.addr %s202, 12
        %s210 = sadd.s32 %s208, %s209
        %s211 = smul.addr %s210, 4
        %s212 = scalar_lea.vmem %s1, %s211
        %s213 = smul.u32 6, %s20
        %s214 = smul.u32 2, %s19
      $region24: #{conv_module_forward.2} parent=19 // pred_fallthru
        _
    $region20: #{conv_module_forward.2} parent=5 // pred_fallthru
      _
    %p215 = scmp.le.s32.totalorder 1, %s11
    %p216 = scmp.lt.s32.totalorder %s11, 3
    %p217 = pnand %p215, %p216
    %p218 = pneg %p217
    // Predicated region
    $region25: #{conv_module_forward.2} parent=5 // pred_check
      _
    $region26: #{conv_module_forward.2} parent=5 // pred_check_branch
      %220 = sbr.rel (%p217) target = $region28
    $region27: #{conv_module_forward.2} parent=5 // pred_region
      %s221 = ssub.s32 %s11, 1
      %p222 = scmp.lt.s32.totalorder %s23, 0
      %s223 = scalar_select %p222, %s23, 0
      %s224 = smul.addr %s223, 4
      %s225 = scalar_lea.vmem %s0, %s224
      %p226 = pneg %p56
      %p227 = pneg %p53
      %s228 = smul.u32 6, %s23
      %s229 = smul.u32 2, %s22
      %p230 = scmp.lt.s32.totalorder %s21, 1
      %s231 = scalar_select %p230, %s21, 1
      %p232 = scmp.lt.s32.totalorder %s228, 5
      %s233 = scalar_select %p232, %s228, 5
      %p234 = scmp.lt.s32.totalorder %s229, 1
      %s235 = scalar_select %p234, %s229, 1
      %s236 = smul.addr %s233, 2
      %s237 = sadd.s32 %s235, %s236
      %s238 = smul.addr %s231, 12
      %s239 = sadd.s32 %s237, %s238
      %s240 = smul.addr %s239, 4
      %s241 = scalar_lea.vmem %s1, %s240
      %p242 = pneg %p86
      %p243 = pneg %p83
      %p244 = pneg %p114
      %p245 = pneg %p111
      %s246 = smul.u32 2, %s22
      %p247 = scmp.lt.s32.totalorder %s21, 1
      %s248 = scalar_select %p247, %s21, 1
      %p249 = scmp.lt.s32.totalorder %s246, 1
      %s250 = scalar_select %p249, %s246, 1
      %s251 = smul.addr %s248, 2
      %s252 = sadd.s32 %s250, %s251
      %s253 = smul.addr %s252, 8
      %s254 = scalar_lea.vmem %s2, %s253
      %p255 = pneg %p142
      %p256 = pneg %p139
      %p257 = scmp.lt.s32.totalorder %s21, 1
      %s258 = scalar_select %p257, %s21, 1
      %p259 = scmp.lt.s32.totalorder %s22, 0
      %s260 = scalar_select %p259, %s22, 0
      %s261 = sadd.s32 %s260, %s258
      %s262 = smul.addr %s261, 8
      %s263 = scalar_lea.vmem %s3, %s262
      %p264 = pneg %p170
      %p265 = pneg %p167
      %p266 = scmp.lt.s32.totalorder %s21, 1
      %s267 = scalar_select %p266, %s21, 1
      %p268 = scmp.lt.s32.totalorder %s22, 0
      %s269 = scalar_select %p268, %s22, 0
      %s270 = sadd.s32 %s269, %s267
      %s271 = smul.addr %s270, 8
      %s272 = scalar_lea.vmem %s4, %s271
      %p273 = scmp.lt.s32.totalorder %s23, 0
      %s274 = scalar_select %p273, %s23, 0
      %s275 = smul.addr %s274, 4
      %s276 = scalar_lea.vmem %s0, %s275
      %s277 = smul.u32 6, %s23
      %s278 = smul.u32 2, %s22
      %p279 = scmp.lt.s32.totalorder %s21, 1
      %s280 = scalar_select %p279, %s21, 1
      %p281 = scmp.lt.s32.totalorder %s277, 5
      %s282 = scalar_select %p281, %s277, 5
      %p283 = scmp.lt.s32.totalorder %s278, 1
      %s284 = scalar_select %p283, %s278, 1
      %s285 = smul.addr %s282, 2
      %s286 = sadd.s32 %s284, %s285
      %s287 = smul.addr %s280, 12
      %s288 = sadd.s32 %s286, %s287
      %s289 = smul.addr %s288, 4
      %s290 = scalar_lea.vmem %s1, %s289
      %s291 = smul.u32 6, %s23
      %s292 = smul.u32 2, %s22
      %s293 = smul.u32 2, %s22
      %p294 = scmp.lt.s32.totalorder %s21, 1
      %s295 = scalar_select %p294, %s21, 1
      %p296 = scmp.lt.s32.totalorder %s293, 1
      %s297 = scalar_select %p296, %s293, 1
      %s298 = smul.addr %s295, 2
      %s299 = sadd.s32 %s297, %s298
      %s300 = smul.addr %s299, 8
      %s301 = scalar_lea.vmem %s2, %s300
      %s302 = smul.u32 2, %s22
      %p303 = scmp.lt.s32.totalorder %s21, 1
      %s304 = scalar_select %p303, %s21, 1
      %p305 = scmp.lt.s32.totalorder %s22, 0
      %s306 = scalar_select %p305, %s22, 0
      %s307 = sadd.s32 %s306, %s304
      %s308 = smul.addr %s307, 8
      %s309 = scalar_lea.vmem %s3, %s308
      %p310 = scmp.lt.s32.totalorder %s21, 1
      %s311 = scalar_select %p310, %s21, 1
      %p312 = scmp.lt.s32.totalorder %s22, 0
      %s313 = scalar_select %p312, %s22, 0
      %s314 = sadd.s32 %s313, %s311
      %s315 = smul.addr %s314, 8
      %s316 = scalar_lea.vmem %s4, %s315
      %p318 = scmp.eq.s32.totalorder %s23, 0
      // Predicated region
      $region29: #{conv_module_forward.2} parent=27 // pred_check
        %p319 = pneg %p318
      $region30: #{conv_module_forward.2} parent=27 // pred_check_branch
        %321 = sbr.rel (%p319) target = $region32
      $region31: #{conv_module_forward.2} parent=27 // pred_region
        %322 = vst [vmem:[#allocation2] sm:$0xff] 0.0
        %323 = vst [vmem:[#allocation2 + $0x8] sm:$0xff] 0.0
      $region32: #{conv_module_forward.2} parent=27 // pred_fallthru
        _
      %v324 = vld [vmem:[#allocation2] sm:$0xff]
      %v325 = vld [vmem:[#allocation2 + $0x8] sm:$0xff]
      %v326 = vld [vmem:[%s276] sm:$0xf]
      %v327 = vld [vmem:[%s290] sm:$0xff]
      %v328 = vld [vmem:[%s290 + $0x8] sm:$0xff]
      %v329 = vld [vmem:[%s290 + $0x10] sm:$0xff]
      %v330 = vld [vmem:[%s290 + $0x18] sm:$0xff]
      %v331 = vld [vmem:[%s290 + $0x20] sm:$0xff]
      %v332 = vld [vmem:[%s290 + $0x28] sm:$0xff]
      %v339 = vunpack.c.l.b16 %v327
      %v340 = vunpack.c.h.b16 %v327
      %v341 = vunpack.c.l.b16 %v328
      %v342 = vunpack.c.h.b16 %v328
      %v343 = vunpack.c.l.b16 %v329
      %v344 = vunpack.c.h.b16 %v329
      %v345 = vunpack.c.l.b16 %v330
      %v346 = vunpack.c.h.b16 %v330
      %v347 = vunpack.c.l.b16 %v331
      %v348 = vunpack.c.h.b16 %v331
      %v349 = vunpack.c.l.b16 %v332
      %v350 = vunpack.c.h.b16 %v332
      %v351 = vpack.c.b16 %v341, %v339
      %v352 = vpack.c.b16 %v342, %v340
      %v353 = vpack.c.b16 %v345, %v343
      %v354 = vpack.c.b16 %v346, %v344
      %v355 = vpack.c.b16 %v349, %v347
      %v356 = vpack.c.b16 %v350, %v348
      %vm363 = vcmask 392192
      %v365 = vsel %vm363, %v326, 0
      %367 = vmatprep.subr.bf16.mxu0 0
      %368 = vmatpush1.bf16.msra.mxu0 0
      %369 = vmatprep.subr.bf16.mxu0 0
      %370 = vmatpush1.bf16.msra.mxu0 0
      %371 = vmatprep.subr.bf16.mxu0 0
      %372 = vmatpush1.bf16.msra.mxu0 0
      %373 = vmatprep.subr.bf16.mxu0 0
      %374 = vmatpush1.bf16.msra.mxu0 0
      %375 = vmatprep.subr.bf16.mxu0 0
      %376 = vmatpush1.bf16.msra.mxu0 0
      %377 = vmatprep.subr.bf16.mxu0 %v356
      %378 = vmatpush1.bf16.msra.mxu0 %v355
      %379 = vmatprep.subr.bf16.mxu0 %v354
      %380 = vmatpush1.bf16.msra.mxu0 %v353
      %381 = vmatprep.subr.bf16.mxu0 %v352
      %382 = vmatpush1.bf16.msra.mxu0 %v351
      %383 = vmatprep.subr.bf16.mxu0 0
      %384 = vmatpush2.bf16.msra.mxu0 0
      %385 = vmatprep.subr.bf16.mxu0 0
      %386 = vmatpush2.bf16.msra.mxu0 0
      %387 = vmatprep.subr.bf16.mxu0 0
      %388 = vmatpush2.bf16.msra.mxu0 0
      %389 = vmatprep.subr.bf16.mxu0 0
      %390 = vmatpush2.bf16.msra.mxu0 0
      %391 = vmatprep.subr.bf16.mxu0 0
      %392 = vmatpush2.bf16.msra.mxu0 0
      %393 = vmatprep.subr.bf16.mxu0 0
      %394 = vmatpush2.bf16.msra.mxu0 0
      %395 = vmatprep.subr.bf16.mxu0 0
      %396 = vmatpush2.bf16.msra.mxu0 0
      %397 = vmatprep.subr.bf16.mxu0 0
      %398 = vmatpush2.bf16.msra.mxu0 0
      %399 = vmatprep.mubr.bf16.mxu0 0
      %400 = vmatmul.mubr.bf16.gmra.mxu0 %v365
      %v401 = vpop.f32.mrf.mxu0
      %v402 = vadd.f32 0.0, %v401
      %v403 = vpop.f32.mrf.mxu0
      %v404 = vadd.f32 0.0, %v403
      %v405 = vpop.f32.mrf.mxu0
      %v406 = vpop.f32.mrf.mxu0
      %407 = vdwg.mxu0
      %v408 = vadd.f32 %v324, %v402
      %v409 = vadd.f32 %v325, %v404
      %410 = vst [vmem:[#allocation2] sm:$0xff] %v408
      %411 = vst [vmem:[#allocation2 + $0x8] sm:$0xff] %v409
      // Predicated region
      $region33: #{conv_module_forward.2} parent=27 // pred_check
        %p412 = pneg %p318
      $region34: #{conv_module_forward.2} parent=27 // pred_check_branch
        %414 = sbr.rel (%p412) target = $region36
      $region35: #{conv_module_forward.2} parent=27 // pred_region
        %v415 = vld [vmem:[#allocation2] sm:$0xff]
        %v416 = vld [vmem:[#allocation2 + $0x8] sm:$0xff]
        %vm417 = vcmp.ge.f32.partialorder %v415, 0.0
        %vm418 = vcmp.ge.f32.partialorder %v416, 0.0
        %v419 = vmul.f32 %v415, 8.0
        %v420 = vmul.f32 %v416, 8.0
        %v421 = vsel %vm417, %v415, %v419
        %v422 = vsel %vm418, %v416, %v420
        %423 = vst [vmem:[%s301] sm:$0xff] %v421
        %424 = vst [vmem:[%s301 + $0x8] sm:$0xff] %v422
        %v425 = vadd.f32 %v421, %v422
        %426 = vadd.xlane.f32.xlu0 %v425
        %v427 = vpop.xlane.xlu0 %426
        %vm428 = vcmask 7168
        %429 = vst.msk [vmem:[%s309] sm:$0xff] %vm428, %v427
        %v430 = vmul.f32 %v421, %v421
        %v431 = vmul.f32 %v422, %v422
        %v432 = vadd.f32 %v430, %v431
        %433 = vadd.xlane.f32.xlu0 %v432
        %v434 = vpop.xlane.xlu0 %433
        %435 = vst.msk [vmem:[%s316] sm:$0xff] %vm428, %v434
      $region36: #{conv_module_forward.2} parent=27 // pred_fallthru
        _
      %s436 = smul.u32 2, %s22
      %p437 = scmp.lt.s32.totalorder %s21, 1
      %s438 = scalar_select %p437, %s21, 1
      %p439 = scmp.lt.s32.totalorder %s436, 1
      %s440 = scalar_select %p439, %s436, 1
      %s441 = smul.addr %s438, 2
      %s442 = sadd.s32 %s440, %s441
      %s443 = smul.addr %s442, 8
      %s444 = scalar_lea.vmem %s2, %s443
      %p445 = scmp.lt.s32.totalorder %s21, 1
      %s446 = scalar_select %p445, %s21, 1
      %p447 = scmp.lt.s32.totalorder %s22, 0
      %s448 = scalar_select %p447, %s22, 0
      %s449 = sadd.s32 %s448, %s446
      %s450 = smul.addr %s449, 8
      %s451 = scalar_lea.vmem %s3, %s450
      %p452 = scmp.lt.s32.totalorder %s21, 1
      %s453 = scalar_select %p452, %s21, 1
      %p454 = scmp.lt.s32.totalorder %s22, 0
      %s455 = scalar_select %p454, %s22, 0
      %s456 = sadd.s32 %s455, %s453
      %s457 = smul.addr %s456, 8
      %s458 = scalar_lea.vmem %s4, %s457
      // Predicated region
      $region37: #{conv_module_forward.2} parent=27 // pred_check
        %p459 = pneg %p111
      $region38: #{conv_module_forward.2} parent=27 // pred_check_branch
        %461 = sbr.rel (%p459) target = $region40
      $region39: #{conv_module_forward.2} parent=27 // pred_region
        %s462 = smul.u32 2, %s22
      $region40: #{conv_module_forward.2} parent=27 // pred_fallthru
        _
      // Predicated region
      $region41: #{conv_module_forward.2} parent=27 // pred_check
        %p463 = pneg %p139
      $region42: #{conv_module_forward.2} parent=27 // pred_check_branch
        %465 = sbr.rel (%p463) target = $region44
      $region43: #{conv_module_forward.2} parent=27 // pred_region
        _
      $region44: #{conv_module_forward.2} parent=27 // pred_fallthru
        _
      // Predicated region
      $region45: #{conv_module_forward.2} parent=27 // pred_check
        %p466 = pneg %p167
      $region46: #{conv_module_forward.2} parent=27 // pred_check_branch
        %468 = sbr.rel (%p466) target = $region48
      $region47: #{conv_module_forward.2} parent=27 // pred_region
        _
      $region48: #{conv_module_forward.2} parent=27 // pred_fallthru
        _
    $region28: #{conv_module_forward.2} parent=5 // pred_fallthru
      _
    %p469 = scmp.le.s32.totalorder 2, %s11
    // Predicated region
    $region49: #{conv_module_forward.2} parent=5 // pred_check
      %p470 = pneg %p469
    $region50: #{conv_module_forward.2} parent=5 // pred_check_branch
      %472 = sbr.rel (%p470) target = $region52
    $region51: #{conv_module_forward.2} parent=5 // pred_region
      %s473 = ssub.s32 %s11, 2
      // Predicated region
      $region53: #{conv_module_forward.2} parent=51 // pred_check
        %p474 = pneg %p117
      $region54: #{conv_module_forward.2} parent=51 // pred_check_branch
        %476 = sbr.rel (%p474) target = $region56
      $region55: #{conv_module_forward.2} parent=51 // pred_region
        %s477 = smul.u32 2, %s25
        %p478 = scmp.lt.s32.totalorder %s24, 1
        %s479 = scalar_select %p478, %s24, 1
        %p480 = scmp.lt.s32.totalorder %s477, 1
        %s481 = scalar_select %p480, %s477, 1
        %s482 = smul.addr %s479, 2
        %s483 = sadd.s32 %s481, %s482
        %s484 = smul.addr %s483, 8
        %s485 = scalar_lea.vmem %s2, %s484
      $region56: #{conv_module_forward.2} parent=51 // pred_fallthru
        _
      // Predicated region
      $region57: #{conv_module_forward.2} parent=51 // pred_check
        %p486 = pneg %p145
      $region58: #{conv_module_forward.2} parent=51 // pred_check_branch
        %488 = sbr.rel (%p486) target = $region60
      $region59: #{conv_module_forward.2} parent=51 // pred_region
        %p489 = scmp.lt.s32.totalorder %s24, 1
        %s490 = scalar_select %p489, %s24, 1
        %p491 = scmp.lt.s32.totalorder %s25, 0
        %s492 = scalar_select %p491, %s25, 0
        %s493 = sadd.s32 %s492, %s490
        %s494 = smul.addr %s493, 8
        %s495 = scalar_lea.vmem %s3, %s494
      $region60: #{conv_module_forward.2} parent=51 // pred_fallthru
        _
      // Predicated region
      $region61: #{conv_module_forward.2} parent=51 // pred_check
        %p496 = pneg %p173
      $region62: #{conv_module_forward.2} parent=51 // pred_check_branch
        %498 = sbr.rel (%p496) target = $region64
      $region63: #{conv_module_forward.2} parent=51 // pred_region
        %p499 = scmp.lt.s32.totalorder %s24, 1
        %s500 = scalar_select %p499, %s24, 1
        %p501 = scmp.lt.s32.totalorder %s25, 0
        %s502 = scalar_select %p501, %s25, 0
        %s503 = sadd.s32 %s502, %s500
        %s504 = smul.addr %s503, 8
        %s505 = scalar_lea.vmem %s4, %s504
      $region64: #{conv_module_forward.2} parent=51 // pred_fallthru
        _
    $region52: #{conv_module_forward.2} parent=5 // pred_fallthru
      _
  $region6: #{conv_module_forward.2} parent=0 // loop_footer
    %s15 = sadd.s32 1, %s11
  $region7: #{conv_module_forward.2} parent=0 // loop_footer_branch
    %10 = sbr.rel target = $region3
  $region8: #{conv_module_forward.2} parent=0 // loop_exit
    _

</llo_original>
